<compile_context>
chip_gen: v5e
topology: v5e:2x2
jax: 0.10.0
libtpu: 0.0.40
codegen_flags: <defaults>
</compile_context>

<pallas_src>
import functools

import jax
import jax.numpy as jnp
from jax.experimental import pallas as pl
from jax.experimental.pallas import tpu as pltpu


def _lcn_kernel(x_ref, w_ref, b_ref, o_ref, *, toc):
    """One grid step: a (TB batch) x (TOC output-channel) tile.

    x_ref: (TB,  R, S)   im2col taps, R = K*K*C, S = W*H (lane-dense)
    w_ref: (TOC, R, S)   per-pixel weights for this OC tile
    b_ref: (TOC, S)      per-pixel bias for this OC tile
    o_ref: (TB, TOC, S)  output tile
    """
    # Single upcast per block (casts hoisted out of the tap/channel reduction).
    xv = x_ref[...].astype(jnp.float32)          # (TB, R, S)
    wv = w_ref[...].astype(jnp.float32)          # (TOC, R, S)
    bv = b_ref[...].astype(jnp.float32)          # (TOC, S)
    # Small static unroll over the OC tile; each step is a VPU multiply plus a
    # sublane reduction over R, on full-width (S % 128 == 0) lanes.
    for k in range(toc):
        acc = bv[k:k + 1, :] + jnp.sum(xv * wv[k:k + 1], axis=1)   # (TB, S)
        o_ref[:, k, :] = acc.astype(o_ref.dtype)                   # lane-dense store


def lcn2d_prepare_params(weights, bias, kernel=3):
    """One-time parameter re-layout (call at model-load time, not per forward).

    weights: [C, W, H, OC, K, K] -> [OC, K*K*C, W*H]
    bias:    [W, H, OC]          -> [OC, W*H]
    Tap/channel ordering along the reduction axis is ((i*K + j)*C + c), matching
    the im2col layout produced by lcn2d_forward.
    """
    C, W, H, OC, K, K2 = weights.shape
    assert K == kernel and K2 == kernel
    wr = jnp.transpose(weights, (3, 4, 5, 0, 1, 2)).reshape(OC, K * K * C, W * H)
    br = jnp.transpose(bias, (2, 0, 1)).reshape(OC, W * H)
    return wr, br


def lcn2d_forward(x, wr, br, *, width, height, kernel=3, block_b=None, block_oc=None):
    """x: [B, C, W, H]; wr: [OC, K*K*C, W*H]; br: [OC, W*H] -> [B, OC, W, H]."""
    B, C, W, H = x.shape
    assert (W, H) == (width, height)
    OC = wr.shape[0]
    K = kernel
    p = (K - 1) // 2
    R = K * K * C
    S = W * H

    # --- Glue (plain JAX): symmetric pad + im2col tap build (lane-dense S axis).
    px = jnp.pad(x, ((0, 0), (0, 0), (p, p), (p, p)), mode="symmetric")
    taps = []
    for i in range(K):
        for j in range(K):
            taps.append(px[:, :, i:i + W, j:j + H])      # (B, C, W, H), static crop
    x_taps = jnp.stack(taps, axis=1).reshape(B, R, S)    # (B, K*K*C, W*H)

    # --- Tile sizes. Defaults cover the whole (small) problem in one fat step;
    # for large OC/B, shrink block_oc first (keep it a multiple of 8) so the
    # double-buffered weight block stays well under VMEM (v7x: 64 MiB total).
    TB = B if block_b is None else block_b
    TOC = OC if block_oc is None else block_oc
    assert B % TB == 0 and OC % TOC == 0
    assert TOC == OC or TOC % 8 == 0, "OC tile must be full or a multiple of 8"

    kernel_fn = functools.partial(_lcn_kernel, toc=TOC)

    out_flat = pl.pallas_call(
        kernel_fn,
        out_shape=jax.ShapeDtypeStruct((B, OC, S), x.dtype),
        grid_spec=pltpu.PrefetchScalarGridSpec(
            num_scalar_prefetch=0,
            # OC tiles outermost, batch innermost: the weight block's index_map
            # is constant over the inner axis -> weights stay resident in VMEM.
            grid=(OC // TOC, B // TB),
            in_specs=[
                pl.BlockSpec((TB, R, S), lambda o, b: (b, 0, 0)),    # x_taps
                pl.BlockSpec((TOC, R, S), lambda o, b: (o, 0, 0)),   # weights
                pl.BlockSpec((TOC, S), lambda o, b: (o, 0)),         # bias
            ],
            out_specs=pl.BlockSpec((TB, TOC, S), lambda o, b: (b, o, 0)),
        ),
        compiler_params=pltpu.CompilerParams(
            dimension_semantics=("parallel", "parallel")),
    )(x_taps, wr, br)

    # Contiguous reshape back to [B, OC, W, H] (no transpose).
    return out_flat.reshape(B, OC, W, H)


def lcn2d_reference(x, weights, bias, kernel=3):
    """Pure-JAX transliteration of the PyTorch forward (for correctness check)."""
    B, C, W, H = x.shape
    OC = weights.shape[3]
    K = kernel
    p = (K - 1) // 2
    px = jnp.pad(x, ((0, 0), (0, 0), (p, p), (p, p)), mode="symmetric")
    outs = []
    for k in range(OC):
        acc = None
        for i in range(K):
            for j in range(K):
                crop = px[:, :, i:i + W, j:j + H]              # (B, C, W, H)
                wf = weights[:, :, :, k, i, j]                 # (C, W, H)
                lcn = jnp.sum(wf[None] * crop, axis=1)         # (B, W, H)
                if acc is None:
                    acc = lcn + bias[:, :, k]
                else:
                    acc = acc + lcn
        outs.append(acc[:, None])
    return jnp.concatenate(outs, axis=1)


if __name__ == "__main__":
    # Small, LCN-consistent shapes.
    B, C, OC, W, H, K = 2, 4, 4, 16, 16, 3

    key = jax.random.PRNGKey(0)
    kx, kw, kb = jax.random.split(key, 3)
    x = jax.random.normal(kx, (B, C, W, H), dtype=jnp.float32)
    # nn.Parameter shapes from __init__ (zeros in the module; deterministic
    # random values here so the test is meaningful).
    weights = 0.1 * jax.random.normal(kw, (C, W, H, OC, K, K), dtype=jnp.float32)
    bias = 0.1 * jax.random.normal(kb, (W, H, OC), dtype=jnp.float32)

    # One-time parameter re-layout (model-load time).
    wr, br = lcn2d_prepare_params(weights, bias, kernel=K)

    fwd = jax.jit(functools.partial(lcn2d_forward, width=W, height=H, kernel=K))
    out = jax.block_until_ready(fwd(x, wr, br))

    ref = jax.block_until_ready(lcn2d_reference(x, weights, bias, kernel=K))
    assert out.shape == (B, OC, W, H), out.shape
    err = float(jnp.max(jnp.abs(out - ref)))
    assert jnp.allclose(out, ref, atol=1e-5, rtol=1e-5), err

    print("KERNEL_OK")
</pallas_src>

<mosaic_0001>
module attributes {stable_mosaic.version = 11 : i64} {
  func.func @_lcn_kernel(%arg0: i32, %arg1: i32, %arg2: memref<2x36x256xf32, #tpu.memory_space<vmem>>, %arg3: memref<4x36x256xf32, #tpu.memory_space<vmem>>, %arg4: memref<4x256xf32, #tpu.memory_space<vmem>>, %arg5: memref<2x4x256xf32, #tpu.memory_space<vmem>>) attributes {dimension_semantics = [#tpu.dimension_semantics<parallel>, #tpu.dimension_semantics<parallel>], iteration_bounds = array<i64: 1, 1>, scalar_prefetch = 0 : i64, scratch_operands = 0 : i64, tpu.core_type = #tpu.core_type<tc>, window_params = [{transform_indices = @transform_0, window_bounds = array<i64: 2, 36, 256>}, {transform_indices = @transform_1, window_bounds = array<i64: 4, 36, 256>}, {transform_indices = @transform_2, window_bounds = array<i64: 4, 256>}, {transform_indices = @transform_3, window_bounds = array<i64: 2, 4, 256>}]} {
    %c0 = arith.constant 0 : index
    %c0_0 = arith.constant 0 : index
    %c0_1 = arith.constant 0 : index
    %0 = vector.load %arg2[%c0, %c0_0, %c0_1] : memref<2x36x256xf32, #tpu.memory_space<vmem>>, vector<2x36x256xf32>
    %c0_2 = arith.constant 0 : index
    %c0_3 = arith.constant 0 : index
    %c0_4 = arith.constant 0 : index
    %1 = vector.load %arg3[%c0_2, %c0_3, %c0_4] : memref<4x36x256xf32, #tpu.memory_space<vmem>>, vector<4x36x256xf32>
    %c0_5 = arith.constant 0 : index
    %c0_6 = arith.constant 0 : index
    %2 = vector.load %arg4[%c0_5, %c0_6] : memref<4x256xf32, #tpu.memory_space<vmem>>, vector<4x256xf32>
    %3 = vector.extract_strided_slice %2 {offsets = [0, 0], sizes = [1, 256], strides = [1, 1]} : vector<4x256xf32> to vector<1x256xf32>
    %4 = vector.extract_strided_slice %1 {offsets = [0, 0, 0], sizes = [1, 36, 256], strides = [1, 1, 1]} : vector<4x36x256xf32> to vector<1x36x256xf32>
    %5 = vector.broadcast %4 : vector<1x36x256xf32> to vector<2x36x256xf32>
    %6 = arith.mulf %0, %5 : vector<2x36x256xf32>
    %cst = arith.constant dense<0.000000e+00> : vector<2x256xf32>
    %7 = vector.multi_reduction <add>, %6, %cst [1] : vector<2x36x256xf32> to vector<2x256xf32>
    %8 = vector.broadcast %3 : vector<1x256xf32> to vector<2x256xf32>
    %9 = arith.addf %8, %7 : vector<2x256xf32>
    %c0_7 = arith.constant 0 : index
    %c0_8 = arith.constant 0 : index
    %c0_9 = arith.constant 0 : index
    %10 = vector.load %arg5[%c0_7, %c0_8, %c0_9] : memref<2x4x256xf32, #tpu.memory_space<vmem>>, vector<2x1x256xf32>
    %11 = vector.shape_cast %10 : vector<2x1x256xf32> to vector<2x256xf32>
    %12 = vector.shape_cast %9 : vector<2x256xf32> to vector<2x1x256xf32>
    tpu.vector_store %arg5[%c0_7, %c0_8, %c0_9], %12 {strides = array<i32>} : memref<2x4x256xf32, #tpu.memory_space<vmem>>, vector<2x1x256xf32>,
    %13 = vector.extract_strided_slice %2 {offsets = [1, 0], sizes = [1, 256], strides = [1, 1]} : vector<4x256xf32> to vector<1x256xf32>
    %14 = vector.extract_strided_slice %1 {offsets = [1, 0, 0], sizes = [1, 36, 256], strides = [1, 1, 1]} : vector<4x36x256xf32> to vector<1x36x256xf32>
    %15 = vector.broadcast %14 : vector<1x36x256xf32> to vector<2x36x256xf32>
    %16 = arith.mulf %0, %15 : vector<2x36x256xf32>
    %cst_10 = arith.constant dense<0.000000e+00> : vector<2x256xf32>
    %17 = vector.multi_reduction <add>, %16, %cst_10 [1] : vector<2x36x256xf32> to vector<2x256xf32>
    %18 = vector.broadcast %13 : vector<1x256xf32> to vector<2x256xf32>
    %19 = arith.addf %18, %17 : vector<2x256xf32>
    %c0_11 = arith.constant 0 : index
    %c1 = arith.constant 1 : index
    %c0_12 = arith.constant 0 : index
    %20 = vector.load %arg5[%c0_11, %c1, %c0_12] : memref<2x4x256xf32, #tpu.memory_space<vmem>>, vector<2x1x256xf32>
    %21 = vector.shape_cast %20 : vector<2x1x256xf32> to vector<2x256xf32>
    %22 = vector.shape_cast %19 : vector<2x256xf32> to vector<2x1x256xf32>
    tpu.vector_store %arg5[%c0_11, %c1, %c0_12], %22 {strides = array<i32>} : memref<2x4x256xf32, #tpu.memory_space<vmem>>, vector<2x1x256xf32>,
    %23 = vector.extract_strided_slice %2 {offsets = [2, 0], sizes = [1, 256], strides = [1, 1]} : vector<4x256xf32> to vector<1x256xf32>
    %24 = vector.extract_strided_slice %1 {offsets = [2, 0, 0], sizes = [1, 36, 256], strides = [1, 1, 1]} : vector<4x36x256xf32> to vector<1x36x256xf32>
    %25 = vector.broadcast %24 : vector<1x36x256xf32> to vector<2x36x256xf32>
    %26 = arith.mulf %0, %25 : vector<2x36x256xf32>
    %cst_13 = arith.constant dense<0.000000e+00> : vector<2x256xf32>
    %27 = vector.multi_reduction <add>, %26, %cst_13 [1] : vector<2x36x256xf32> to vector<2x256xf32>
    %28 = vector.broadcast %23 : vector<1x256xf32> to vector<2x256xf32>
    %29 = arith.addf %28, %27 : vector<2x256xf32>
    %c0_14 = arith.constant 0 : index
    %c2 = arith.constant 2 : index
    %c0_15 = arith.constant 0 : index
    %30 = vector.load %arg5[%c0_14, %c2, %c0_15] : memref<2x4x256xf32, #tpu.memory_space<vmem>>, vector<2x1x256xf32>
    %31 = vector.shape_cast %30 : vector<2x1x256xf32> to vector<2x256xf32>
    %32 = vector.shape_cast %29 : vector<2x256xf32> to vector<2x1x256xf32>
    tpu.vector_store %arg5[%c0_14, %c2, %c0_15], %32 {strides = array<i32>} : memref<2x4x256xf32, #tpu.memory_space<vmem>>, vector<2x1x256xf32>,
    %33 = vector.extract_strided_slice %2 {offsets = [3, 0], sizes = [1, 256], strides = [1, 1]} : vector<4x256xf32> to vector<1x256xf32>
    %34 = vector.extract_strided_slice %1 {offsets = [3, 0, 0], sizes = [1, 36, 256], strides = [1, 1, 1]} : vector<4x36x256xf32> to vector<1x36x256xf32>
    %35 = vector.broadcast %34 : vector<1x36x256xf32> to vector<2x36x256xf32>
    %36 = arith.mulf %0, %35 : vector<2x36x256xf32>
    %cst_16 = arith.constant dense<0.000000e+00> : vector<2x256xf32>
    %37 = vector.multi_reduction <add>, %36, %cst_16 [1] : vector<2x36x256xf32> to vector<2x256xf32>
    %38 = vector.broadcast %33 : vector<1x256xf32> to vector<2x256xf32>
    %39 = arith.addf %38, %37 : vector<2x256xf32>
    %c0_17 = arith.constant 0 : index
    %c3 = arith.constant 3 : index
    %c0_18 = arith.constant 0 : index
    %40 = vector.load %arg5[%c0_17, %c3, %c0_18] : memref<2x4x256xf32, #tpu.memory_space<vmem>>, vector<2x1x256xf32>
    %41 = vector.shape_cast %40 : vector<2x1x256xf32> to vector<2x256xf32>
    %42 = vector.shape_cast %39 : vector<2x256xf32> to vector<2x1x256xf32>
    tpu.vector_store %arg5[%c0_17, %c3, %c0_18], %42 {strides = array<i32>} : memref<2x4x256xf32, #tpu.memory_space<vmem>>, vector<2x1x256xf32>,
    return
  }
  func.func @transform_0(%arg0: i32, %arg1: i32) -> (i32, i32, i32) {
    %c0_i32 = arith.constant 0 : i32
    %c0_i32_0 = arith.constant 0 : i32
    %c0_i32_1 = arith.constant 0 : i32
    return %arg1, %c0_i32, %c0_i32_0 : i32, i32, i32
  }
  func.func @transform_1(%arg0: i32, %arg1: i32) -> (i32, i32, i32) {
    %c0_i32 = arith.constant 0 : i32
    %c0_i32_0 = arith.constant 0 : i32
    %c0_i32_1 = arith.constant 0 : i32
    return %arg0, %c0_i32, %c0_i32_0 : i32, i32, i32
  }
  func.func @transform_2(%arg0: i32, %arg1: i32) -> (i32, i32) {
    %c0_i32 = arith.constant 0 : i32
    %c0_i32_0 = arith.constant 0 : i32
    return %arg0, %c0_i32 : i32, i32
  }
  func.func @transform_3(%arg0: i32, %arg1: i32) -> (i32, i32, i32) {
    %c0_i32 = arith.constant 0 : i32
    %c0_i32_0 = arith.constant 0 : i32
    return %arg1, %arg0, %c0_i32 : i32, i32, i32
  }
}

</mosaic_0001>

<llo_original>
// kernel: lcn2d_forward.1
$region0: #{lcn2d_forward.1}
  #allocation0 [shape = 'u32[]', space=smem, size = 0x4, offset = 0x4, fixed_abs, tag = 'smem constant byte address 0x4 - core index']
  #allocation1 [shape = 'u32[72,128]{1,0:T(1,128)}', space=vmem, size = 0x9000, scoped, tag = 'internal scratch']
  %s0 = inlined_call_operand.vmem [shape: f32[2,36,256], index: 0, kind: input, shape index: {}]
  %s1 = inlined_call_operand.vmem [shape: f32[4,36,256], index: 1, kind: input, shape index: {}]
  %s2 = inlined_call_operand.vmem [shape: f32[4,256], index: 2, kind: input, shape index: {}]
  %s3 = inlined_call_operand.vmem [shape: f32[2,4,256], index: 3, kind: output, shape index: {}]
  %s4 = sld [smem:[#allocation0]]
  $region22: #{lcn2d_forward.1} parent=0
    _
  %s6 = ssub.s32 1, %s4
  %s7 = scalar_select 0, %s6, %s4
  // Predicated region
  $region2: #{lcn2d_forward.1} parent=0 // pred_check
    _
  $region3: #{lcn2d_forward.1} parent=0 // pred_check_branch
    %9 = sbr.rel (0) target = $region5
  $region4: #{lcn2d_forward.1} parent=0 // pred_region
    _
  $region5: #{lcn2d_forward.1} parent=0 // pred_fallthru
    _
  // Predicated region
  $region6: #{lcn2d_forward.1} parent=0 // pred_check
    _
  $region7: #{lcn2d_forward.1} parent=0 // pred_check_branch
    %11 = sbr.rel (0) target = $region9
  $region8: #{lcn2d_forward.1} parent=0 // pred_region
    _
  $region9: #{lcn2d_forward.1} parent=0 // pred_fallthru
    _
  // Predicated region
  $region10: #{lcn2d_forward.1} parent=0 // pred_check
    _
  $region11: #{lcn2d_forward.1} parent=0 // pred_check_branch
    %13 = sbr.rel (0) target = $region13
  $region12: #{lcn2d_forward.1} parent=0 // pred_region
    _
  $region13: #{lcn2d_forward.1} parent=0 // pred_fallthru
    _
  %v14 = vld [vmem:[%s0] sm:$0xff]
  %v15 = vld [vmem:[%s0 + $0x8] sm:$0xff]
  %v16 = vld [vmem:[%s0 + $0x10] sm:$0xff]
  %v17 = vld [vmem:[%s0 + $0x18] sm:$0xff]
  %v18 = vld [vmem:[%s0 + $0x20] sm:$0xff]
  %v19 = vld [vmem:[%s0 + $0x28] sm:$0xff]
  %v20 = vld [vmem:[%s0 + $0x30] sm:$0xff]
  %v21 = vld [vmem:[%s0 + $0x38] sm:$0xff]
  %v22 = vld [vmem:[%s0 + $0x40] sm:$0xf]
  %v23 = vld [vmem:[%s0 + $0x48] sm:$0xf]
  %v24 = vld [vmem:[%s0 + $0x50] sm:$0xff]
  %v25 = vld [vmem:[%s0 + $0x58] sm:$0xff]
  %v26 = vld [vmem:[%s0 + $0x60] sm:$0xff]
  %v27 = vld [vmem:[%s0 + $0x68] sm:$0xff]
  %v28 = vld [vmem:[%s0 + $0x70] sm:$0xff]
  %v29 = vld [vmem:[%s0 + $0x78] sm:$0xff]
  %v30 = vld [vmem:[%s0 + $0x80] sm:$0xff]
  %v31 = vld [vmem:[%s0 + $0x88] sm:$0xff]
  %v32 = vld [vmem:[%s0 + $0x90] sm:$0xf]
  %v33 = vld [vmem:[%s0 + $0x98] sm:$0xf]
  %v34 = vld [vmem:[%s1] sm:$0xff]
  %v35 = vld [vmem:[%s1 + $0x8] sm:$0xff]
  %v36 = vld [vmem:[%s1 + $0x10] sm:$0xff]
  %v37 = vld [vmem:[%s1 + $0x18] sm:$0xff]
  %v38 = vld [vmem:[%s1 + $0x20] sm:$0xff]
  %v39 = vld [vmem:[%s1 + $0x28] sm:$0xff]
  %v40 = vld [vmem:[%s1 + $0x30] sm:$0xff]
  %v41 = vld [vmem:[%s1 + $0x38] sm:$0xff]
  %v42 = vld [vmem:[%s1 + $0x40] sm:$0xf]
  %v43 = vld [vmem:[%s1 + $0x48] sm:$0xf]
  %v44 = vld [vmem:[%s1 + $0x50] sm:$0xff]
  %v45 = vld [vmem:[%s1 + $0x58] sm:$0xff]
  %v46 = vld [vmem:[%s1 + $0x60] sm:$0xff]
  %v47 = vld [vmem:[%s1 + $0x68] sm:$0xff]
  %v48 = vld [vmem:[%s1 + $0x70] sm:$0xff]
  %v49 = vld [vmem:[%s1 + $0x78] sm:$0xff]
  %v50 = vld [vmem:[%s1 + $0x80] sm:$0xff]
  %v51 = vld [vmem:[%s1 + $0x88] sm:$0xff]
  %v52 = vld [vmem:[%s1 + $0x90] sm:$0xf]
  %v53 = vld [vmem:[%s1 + $0x98] sm:$0xf]
  %v54 = vld [vmem:[%s1 + $0xa0] sm:$0xff]
  %v55 = vld [vmem:[%s1 + $0xa8] sm:$0xff]
  %v56 = vld [vmem:[%s1 + $0xb0] sm:$0xff]
  %v57 = vld [vmem:[%s1 + $0xb8] sm:$0xff]
  %v58 = vld [vmem:[%s1 + $0xc0] sm:$0xff]
  %v59 = vld [vmem:[%s1 + $0xc8] sm:$0xff]
  %v60 = vld [vmem:[%s1 + $0xd0] sm:$0xff]
  %v61 = vld [vmem:[%s1 + $0xd8] sm:$0xff]
  %v62 = vld [vmem:[%s1 + $0xe0] sm:$0xf]
  %v63 = vld [vmem:[%s1 + $0xe8] sm:$0xf]
  %v64 = vld [vmem:[%s1 + $0xf0] sm:$0xff]
  %v65 = vld [vmem:[%s1 + $0xf8] sm:$0xff]
  %v66 = vld [vmem:[%s1 + $0x100] sm:$0xff]
  %v67 = vld [vmem:[%s1 + $0x108] sm:$0xff]
  %v68 = vld [vmem:[%s1 + $0x110] sm:$0xff]
  %v69 = vld [vmem:[%s1 + $0x118] sm:$0xff]
  %v70 = vld [vmem:[%s1 + $0x120] sm:$0xff]
  %v71 = vld [vmem:[%s1 + $0x128] sm:$0xff]
  %v72 = vld [vmem:[%s1 + $0x130] sm:$0xf]
  %v73 = vld [vmem:[%s1 + $0x138] sm:$0xf]
  %v74 = vld [vmem:[%s2] sm:$0xff]
  %v75 = vmul.f32 %v14, %v34
  %v76 = vmul.f32 %v15, %v35
  %v77 = vmul.f32 %v16, %v36
  %v78 = vmul.f32 %v17, %v37
  %v79 = vmul.f32 %v18, %v38
  %v80 = vmul.f32 %v19, %v39
  %v81 = vmul.f32 %v20, %v40
  %v82 = vmul.f32 %v21, %v41
  %v83 = vmul.f32 %v22, %v42
  %v84 = vmul.f32 %v23, %v43
  %v85 = vmul.f32 %v24, %v34
  %v86 = vmul.f32 %v25, %v35
  %v87 = vmul.f32 %v26, %v36
  %v88 = vmul.f32 %v27, %v37
  %v89 = vmul.f32 %v28, %v38
  %v90 = vmul.f32 %v29, %v39
  %v91 = vmul.f32 %v30, %v40
  %v92 = vmul.f32 %v31, %v41
  %v93 = vmul.f32 %v32, %v42
  %v94 = vmul.f32 %v33, %v43
  %v95 = vadd.f32 %v75, %v77
  %v96 = vadd.f32 %v95, %v79
  %v97 = vadd.f32 %v96, %v81
  %vm98 = vcmask 1043456
  %v99 = vsel %vm98, %v83, 0.0
  %v100 = vadd.f32 %v97, %v99
  %v101 = vrot.slane %v100, 4
  %v102 = vadd.f32 %v100, %v101
  %v103 = vrot.slane %v102, 2
  %v104 = vadd.f32 %v102, %v103
  %v105 = vrot.slane %v104, 1
  %v106 = vadd.f32 %v104, %v105
  %v107 = vadd.f32 %v76, %v78
  %v108 = vadd.f32 %v107, %v80
  %v109 = vadd.f32 %v108, %v82
  %v110 = vsel %vm98, %v84, 0.0
  %v111 = vadd.f32 %v109, %v110
  %v112 = vrot.slane %v111, 4
  %v113 = vadd.f32 %v111, %v112
  %v114 = vrot.slane %v113, 2
  %v115 = vadd.f32 %v113, %v114
  %v116 = vrot.slane %v115, 1
  %v117 = vadd.f32 %v115, %v116
  %v118 = vadd.f32 %v85, %v87
  %v119 = vadd.f32 %v118, %v89
  %v120 = vadd.f32 %v119, %v91
  %v121 = vsel %vm98, %v93, 0.0
  %v122 = vadd.f32 %v120, %v121
  %v123 = vrot.slane %v122, 4
  %v124 = vadd.f32 %v122, %v123
  %v125 = vrot.slane %v124, 2
  %v126 = vadd.f32 %v124, %v125
  %v127 = vrot.slane %v126, 1
  %v128 = vadd.f32 %v126, %v127
  %v129 = vadd.f32 %v86, %v88
  %v130 = vadd.f32 %v129, %v90
  %v131 = vadd.f32 %v130, %v92
  %v132 = vsel %vm98, %v94, 0.0
  %v133 = vadd.f32 %v131, %v132
  %v134 = vrot.slane %v133, 4
  %v135 = vadd.f32 %v133, %v134
  %v136 = vrot.slane %v135, 2
  %v137 = vadd.f32 %v135, %v136
  %v138 = vrot.slane %v137, 1
  %v139 = vadd.f32 %v137, %v138
  %v141 = vperm.slane %v74, 0
  %v142 = vperm.slane %v74, 4
  %v145 = vperm.slane %v141, 0
  %v146 = vperm.slane %v142, 0
  %vm151 = vcmask 1041409
  %v152 = vsel %vm151, %v128, %v106
  %v153 = vsel %vm151, %v139, %v117
  %v156 = vadd.f32 %v145, %v152
  %v157 = vadd.f32 %v146, %v153
  %v160 = vrot.slane %v157, 7
  %vm161 = vcmask 1040384
  %v162 = vsel %vm161, %v156, %v160
  %v163 = vsel %vm151, %v156, %v160
  %v164 = vrot.slane %v163, 1
  %v167 = vlaneseq
  %vm168 = vcmp.ge.s32.totalorder %v167, 0
  %vm169 = vcmp.lt.s32.totalorder %v167, 256
  %vm170 = vmand %vm168, %vm169
  %171 = vst.msk [vmem:[%s3] ss:$4 sm:$0x3] %vm170, %v162
  %s172 = scalar_lea.vmem %s3, 8
  %173 = vst.msk [vmem:[%s172] ss:$4 sm:$0x3] %vm170, %v164
  %v174 = vmul.f32 %v14, %v44
  %v175 = vmul.f32 %v15, %v45
  %v176 = vmul.f32 %v16, %v46
  %v177 = vmul.f32 %v17, %v47
  %v178 = vmul.f32 %v18, %v48
  %v179 = vmul.f32 %v19, %v49
  %v180 = vmul.f32 %v20, %v50
  %v181 = vmul.f32 %v21, %v51
  %v182 = vmul.f32 %v22, %v52
  %v183 = vmul.f32 %v23, %v53
  %v184 = vmul.f32 %v24, %v44
  %v185 = vmul.f32 %v25, %v45
  %v186 = vmul.f32 %v26, %v46
  %v187 = vmul.f32 %v27, %v47
  %v188 = vmul.f32 %v28, %v48
  %v189 = vmul.f32 %v29, %v49
  %v190 = vmul.f32 %v30, %v50
  %v191 = vmul.f32 %v31, %v51
  %v192 = vmul.f32 %v32, %v52
  %v193 = vmul.f32 %v33, %v53
  %v194 = vadd.f32 %v174, %v176
  %v195 = vadd.f32 %v194, %v178
  %v196 = vadd.f32 %v195, %v180
  %v197 = vsel %vm98, %v182, 0.0
  %v198 = vadd.f32 %v196, %v197
  %v199 = vrot.slane %v198, 4
  %v200 = vadd.f32 %v198, %v199
  %v201 = vrot.slane %v200, 2
  %v202 = vadd.f32 %v200, %v201
  %v203 = vrot.slane %v202, 1
  %v204 = vadd.f32 %v202, %v203
  %v205 = vadd.f32 %v175, %v177
  %v206 = vadd.f32 %v205, %v179
  %v207 = vadd.f32 %v206, %v181
  %v208 = vsel %vm98, %v183, 0.0
  %v209 = vadd.f32 %v207, %v208
  %v210 = vrot.slane %v209, 4
  %v211 = vadd.f32 %v209, %v210
  %v212 = vrot.slane %v211, 2
  %v213 = vadd.f32 %v211, %v212
  %v214 = vrot.slane %v213, 1
  %v215 = vadd.f32 %v213, %v214
  %v216 = vadd.f32 %v184, %v186
  %v217 = vadd.f32 %v216, %v188
  %v218 = vadd.f32 %v217, %v190
  %v219 = vsel %vm98, %v192, 0.0
  %v220 = vadd.f32 %v218, %v219
  %v221 = vrot.slane %v220, 4
  %v222 = vadd.f32 %v220, %v221
  %v223 = vrot.slane %v222, 2
  %v224 = vadd.f32 %v222, %v223
  %v225 = vrot.slane %v224, 1
  %v226 = vadd.f32 %v224, %v225
  %v227 = vadd.f32 %v185, %v187
  %v228 = vadd.f32 %v227, %v189
  %v229 = vadd.f32 %v228, %v191
  %v230 = vsel %vm98, %v193, 0.0
  %v231 = vadd.f32 %v229, %v230
  %v232 = vrot.slane %v231, 4
  %v233 = vadd.f32 %v231, %v232
  %v234 = vrot.slane %v233, 2
  %v235 = vadd.f32 %v233, %v234
  %v236 = vrot.slane %v235, 1
  %v237 = vadd.f32 %v235, %v236
  %v238 = vperm.slane %v74, 1
  %v239 = vperm.slane %v74, 5
  %v242 = vperm.slane %v238, 1
  %v243 = vperm.slane %v239, 1
  %v248 = vsel %vm151, %v226, %v204
  %v249 = vsel %vm151, %v237, %v215
  %v252 = vadd.f32 %v242, %v248
  %v253 = vadd.f32 %v243, %v249
  %v256 = vrot.slane %v253, 7
  %v257 = vsel %vm161, %v252, %v256
  %v258 = vsel %vm151, %v252, %v256
  %v259 = vrot.slane %v258, 1
  %s262 = scalar_lea.vmem %s3, 1
  %263 = vst.msk [vmem:[%s262] ss:$4 sm:$0x3] %vm170, %v257
  %s264 = scalar_lea.vmem %s3, 9
  %265 = vst.msk [vmem:[%s264] ss:$4 sm:$0x3] %vm170, %v259
  %v266 = vmul.f32 %v14, %v54
  %v267 = vmul.f32 %v15, %v55
  %v268 = vmul.f32 %v16, %v56
  %v269 = vmul.f32 %v17, %v57
  %v270 = vmul.f32 %v18, %v58
  %v271 = vmul.f32 %v19, %v59
  %v272 = vmul.f32 %v20, %v60
  %v273 = vmul.f32 %v21, %v61
  %v274 = vmul.f32 %v22, %v62
  %v275 = vmul.f32 %v23, %v63
  %v276 = vmul.f32 %v24, %v54
  %v277 = vmul.f32 %v25, %v55
  %v278 = vmul.f32 %v26, %v56
  %v279 = vmul.f32 %v27, %v57
  %v280 = vmul.f32 %v28, %v58
  %v281 = vmul.f32 %v29, %v59
  %v282 = vmul.f32 %v30, %v60
  %v283 = vmul.f32 %v31, %v61
  %v284 = vmul.f32 %v32, %v62
  %v285 = vmul.f32 %v33, %v63
  %v286 = vadd.f32 %v266, %v268
  %v287 = vadd.f32 %v286, %v270
  %v288 = vadd.f32 %v287, %v272
  %v289 = vsel %vm98, %v274, 0.0
  %v290 = vadd.f32 %v288, %v289
  %v291 = vrot.slane %v290, 4
  %v292 = vadd.f32 %v290, %v291
  %v293 = vrot.slane %v292, 2
  %v294 = vadd.f32 %v292, %v293
  %v295 = vrot.slane %v294, 1
  %v296 = vadd.f32 %v294, %v295
  %v297 = vadd.f32 %v267, %v269
  %v298 = vadd.f32 %v297, %v271
  %v299 = vadd.f32 %v298, %v273
  %v300 = vsel %vm98, %v275, 0.0
  %v301 = vadd.f32 %v299, %v300
  %v302 = vrot.slane %v301, 4
  %v303 = vadd.f32 %v301, %v302
  %v304 = vrot.slane %v303, 2
  %v305 = vadd.f32 %v303, %v304
  %v306 = vrot.slane %v305, 1
  %v307 = vadd.f32 %v305, %v306
  %v308 = vadd.f32 %v276, %v278
  %v309 = vadd.f32 %v308, %v280
  %v310 = vadd.f32 %v309, %v282
  %v311 = vsel %vm98, %v284, 0.0
  %v312 = vadd.f32 %v310, %v311
  %v313 = vrot.slane %v312, 4
  %v314 = vadd.f32 %v312, %v313
  %v315 = vrot.slane %v314, 2
  %v316 = vadd.f32 %v314, %v315
  %v317 = vrot.slane %v316, 1
  %v318 = vadd.f32 %v316, %v317
  %v319 = vadd.f32 %v277, %v279
  %v320 = vadd.f32 %v319, %v281
  %v321 = vadd.f32 %v320, %v283
  %v322 = vsel %vm98, %v285, 0.0
  %v323 = vadd.f32 %v321, %v322
  %v324 = vrot.slane %v323, 4
  %v325 = vadd.f32 %v323, %v324
  %v326 = vrot.slane %v325, 2
  %v327 = vadd.f32 %v325, %v326
  %v328 = vrot.slane %v327, 1
  %v329 = vadd.f32 %v327, %v328
  %v330 = vperm.slane %v74, 2
  %v331 = vperm.slane %v74, 6
  %v334 = vperm.slane %v330, 2
  %v335 = vperm.slane %v331, 2
  %v340 = vsel %vm151, %v318, %v296
  %v341 = vsel %vm151, %v329, %v307
  %v344 = vadd.f32 %v334, %v340
  %v345 = vadd.f32 %v335, %v341
  %v348 = vrot.slane %v345, 7
  %v349 = vsel %vm161, %v344, %v348
  %v350 = vsel %vm151, %v344, %v348
  %v351 = vrot.slane %v350, 1
  %s354 = scalar_lea.vmem %s3, 2
  %355 = vst.msk [vmem:[%s354] ss:$4 sm:$0x3] %vm170, %v349
  %s356 = scalar_lea.vmem %s3, 10
  %357 = vst.msk [vmem:[%s356] ss:$4 sm:$0x3] %vm170, %v351
  %v358 = vmul.f32 %v14, %v64
  %v359 = vmul.f32 %v15, %v65
  %v360 = vmul.f32 %v16, %v66
  %v361 = vmul.f32 %v17, %v67
  %v362 = vmul.f32 %v18, %v68
  %v363 = vmul.f32 %v19, %v69
  %v364 = vmul.f32 %v20, %v70
  %v365 = vmul.f32 %v21, %v71
  %v366 = vmul.f32 %v22, %v72
  %v367 = vmul.f32 %v23, %v73
  %v368 = vmul.f32 %v24, %v64
  %v369 = vmul.f32 %v25, %v65
  %v370 = vmul.f32 %v26, %v66
  %v371 = vmul.f32 %v27, %v67
  %v372 = vmul.f32 %v28, %v68
  %v373 = vmul.f32 %v29, %v69
  %v374 = vmul.f32 %v30, %v70
  %v375 = vmul.f32 %v31, %v71
  %v376 = vmul.f32 %v32, %v72
  %v377 = vmul.f32 %v33, %v73
  %v378 = vadd.f32 %v358, %v360
  %v379 = vadd.f32 %v378, %v362
  %v380 = vadd.f32 %v379, %v364
  %v381 = vsel %vm98, %v366, 0.0
  %v382 = vadd.f32 %v380, %v381
  %v383 = vrot.slane %v382, 4
  %v384 = vadd.f32 %v382, %v383
  %v385 = vrot.slane %v384, 2
  %v386 = vadd.f32 %v384, %v385
  %v387 = vrot.slane %v386, 1
  %v388 = vadd.f32 %v386, %v387
  %v389 = vadd.f32 %v359, %v361
  %v390 = vadd.f32 %v389, %v363
  %v391 = vadd.f32 %v390, %v365
  %v392 = vsel %vm98, %v367, 0.0
  %v393 = vadd.f32 %v391, %v392
  %v394 = vrot.slane %v393, 4
  %v395 = vadd.f32 %v393, %v394
  %v396 = vrot.slane %v395, 2
  %v397 = vadd.f32 %v395, %v396
  %v398 = vrot.slane %v397, 1
  %v399 = vadd.f32 %v397, %v398
  %v400 = vadd.f32 %v368, %v370
  %v401 = vadd.f32 %v400, %v372
  %v402 = vadd.f32 %v401, %v374
  %v403 = vsel %vm98, %v376, 0.0
  %v404 = vadd.f32 %v402, %v403
  %v405 = vrot.slane %v404, 4
  %v406 = vadd.f32 %v404, %v405
  %v407 = vrot.slane %v406, 2
  %v408 = vadd.f32 %v406, %v407
  %v409 = vrot.slane %v408, 1
  %v410 = vadd.f32 %v408, %v409
  %v411 = vadd.f32 %v369, %v371
  %v412 = vadd.f32 %v411, %v373
  %v413 = vadd.f32 %v412, %v375
  %v414 = vsel %vm98, %v377, 0.0
  %v415 = vadd.f32 %v413, %v414
  %v416 = vrot.slane %v415, 4
  %v417 = vadd.f32 %v415, %v416
  %v418 = vrot.slane %v417, 2
  %v419 = vadd.f32 %v417, %v418
  %v420 = vrot.slane %v419, 1
  %v421 = vadd.f32 %v419, %v420
  %v422 = vperm.slane %v74, 3
  %v423 = vperm.slane %v74, 7
  %v426 = vperm.slane %v422, 3
  %v427 = vperm.slane %v423, 3
  %v432 = vsel %vm151, %v410, %v388
  %v433 = vsel %vm151, %v421, %v399
  %v436 = vadd.f32 %v426, %v432
  %v437 = vadd.f32 %v427, %v433
  %v440 = vrot.slane %v437, 7
  %v441 = vsel %vm161, %v436, %v440
  %v442 = vsel %vm151, %v436, %v440
  %v443 = vrot.slane %v442, 1
  %s446 = scalar_lea.vmem %s3, 3
  %447 = vst.msk [vmem:[%s446] ss:$4 sm:$0x3] %vm170, %v441
  %s448 = scalar_lea.vmem %s3, 11
  %449 = vst.msk [vmem:[%s448] ss:$4 sm:$0x3] %vm170, %v443
  // Predicated region
  $region14: #{lcn2d_forward.1} parent=0 // pred_check
    _
  $region15: #{lcn2d_forward.1} parent=0 // pred_check_branch
    %451 = sbr.rel (0) target = $region17
  $region16: #{lcn2d_forward.1} parent=0 // pred_region
    _
  $region17: #{lcn2d_forward.1} parent=0 // pred_fallthru
    _
  // Predicated region
  $region18: #{lcn2d_forward.1} parent=0 // pred_check
    _
  $region19: #{lcn2d_forward.1} parent=0 // pred_check_branch
    %453 = sbr.rel (0) target = $region21
  $region20: #{lcn2d_forward.1} parent=0 // pred_region
    _
  $region21: #{lcn2d_forward.1} parent=0 // pred_fallthru
    _

</llo_original>
